<compile_context>
chip_gen: v6e
topology: v6e:2x2x1
jax: 0.10.0
libtpu: 0.0.40
codegen_flags: <defaults>
</compile_context>

<pallas_src>
import math

import numpy as np
import jax
import jax.numpy as jnp
from jax.experimental import pallas as pl
from jax.experimental.pallas import tpu as pltpu


def _generate_masks(channels: int, n: int, scale: float) -> np.ndarray:
    """Deterministic stand-in for masksembles.common.generation_wrapper."""
    # TODO(synk): the real generation_wrapper samples masks to hit an exact
    # overlap statistic; this deterministic round-robin keeps ~channels/scale
    # active channels per mask, which is all the forward pass needs.
    if scale == 1:
        return np.ones([n, channels], dtype=np.float64)
    k = max(1, int(round(channels / scale)))
    masks = np.zeros([n, channels], dtype=np.float64)
    for i in range(n):
        idx = (np.arange(k) + i * k) % channels
        masks[i, idx] = 1.0
    return masks


# ---------------------------------------------------------------------------
# Kernels
# ---------------------------------------------------------------------------

def _masksembles_small_kernel(m_ref, x_ref, o_ref):
    # Single program: x_ref/o_ref are the full (n, rows, Cw) arrays in VMEM,
    # m_ref is the full (n, Cw) mask table. Broadcast each group's mask row
    # over that group's rows. 0/1 masks in f32 match PyTorch's double-multiply
    # followed by .float() exactly.
    o_ref[...] = (x_ref[...] * m_ref[...][:, None, :]).astype(o_ref.dtype)


def _masksembles_tiled_kernel(m_ref, x_ref, o_ref):
    # m_ref : (n, Cw)  resident mask table (same block every grid step).
    # x_ref : (tr, Cw) row tile of group g (group dim squeezed out).
    # o_ref : (tr, Cw) matching output tile.
    g = pl.program_id(0)
    m_row = m_ref[pl.ds(g, 1), :]                     # (1, Cw) mask row of group g
    o_ref[...] = (x_ref[...] * m_row).astype(o_ref.dtype)


# ---------------------------------------------------------------------------
# Wrapper
# ---------------------------------------------------------------------------

def _lane_pack_factor(channels: int, group_size: int) -> int:
    """Smallest k with (k*channels) % 128 == 0 that also divides group_size."""
    if channels % 128 == 0:
        return 1
    k0 = 128 // math.gcd(channels, 128)
    return k0 if group_size % k0 == 0 else 1


def masksembles1d(x: jax.Array, masks: jax.Array, *,
                  small_bytes_threshold: int = 1 << 20,
                  block_bytes_cap: int = 4 << 20,
                  vmem_limit_bytes: int = 32 * 1024 * 1024) -> jax.Array:
    """Masksembles1D forward. x: (N, C); masks: (n, C) binary. Returns f32 (N, C)."""
    N, C = x.shape
    n, Cm = masks.shape
    assert Cm == C, "masks channel dim must match input channels"
    assert N % n == 0, "batch must be divisible by number of masks"
    gs = N // n

    masks_f = masks.astype(jnp.float32)

    # Lane-densify: fold k consecutive rows of each group into the lane axis.
    # Element (g, r, j*C + c) of the reshaped array is x[g*gs + r*k + j, c];
    # the matching mask value is masks[g, c], hence the k-fold lane tile below.
    k = _lane_pack_factor(C, gs)
    Cw = k * C
    rows = gs // k
    xr = x.reshape(n, rows, Cw)
    mw = jnp.tile(masks_f, (1, k)) if k > 1 else masks_f          # (n, Cw)

    out_shape = jax.ShapeDtypeStruct((n, rows, Cw), jnp.float32)

    if N * C * 4 <= small_bytes_threshold:
        # Tiny problem: one program, everything resident in VMEM.
        out = pl.pallas_call(
            _masksembles_small_kernel,
            out_shape=out_shape,
            in_specs=[pl.BlockSpec(memory_space=pltpu.MemorySpace.VMEM),
                      pl.BlockSpec(memory_space=pltpu.MemorySpace.VMEM)],
            out_specs=pl.BlockSpec(memory_space=pltpu.MemorySpace.VMEM),
        )(mw, xr)
        return out.reshape(N, C)

    # Row-tile size: largest 8-aligned tile whose block stays under the cap so
    # double-buffered in+out blocks (~4x block) fit every generation's
    # scoped-VMEM budget with headroom.
    row_bytes = Cw * 4
    tr_cap = max(8, (block_bytes_cap // row_bytes) // 8 * 8)
    if rows <= tr_cap:
        tr = rows            # full row extent (valid even if not a multiple of 8)
    else:
        tr = tr_cap          # multiple of 8; ragged tail handled by cdiv grid
    n_row_tiles = pl.cdiv(rows, tr)

    out = pl.pallas_call(
        _masksembles_tiled_kernel,
        out_shape=out_shape,
        grid_spec=pltpu.PrefetchScalarGridSpec(
            num_scalar_prefetch=0,
            grid=(n, n_row_tiles),
            in_specs=[
                # Resident mask table: constant block index -> DMA'd once.
                pl.BlockSpec((n, Cw), lambda g, r: (0, 0)),
                # One (tr, Cw) row tile of group g (group dim squeezed).
                pl.BlockSpec((None, tr, Cw), lambda g, r: (g, r, 0)),
            ],
            out_specs=pl.BlockSpec((None, tr, Cw), lambda g, r: (g, r, 0)),
        ),
        compiler_params=pltpu.CompilerParams(
            dimension_semantics=("parallel", "parallel"),
            vmem_limit_bytes=vmem_limit_bytes,
        ),
    )(mw, xr)
    return out.reshape(N, C)


# ---------------------------------------------------------------------------
# Demo / self-check
# ---------------------------------------------------------------------------

if __name__ == "__main__":
    channels, n, scale = 16, 4, 2.0
    masks_np = _generate_masks(channels, n, scale)
    masks = jnp.asarray(masks_np, dtype=jnp.float32)

    def reference(x, masks, n):
        N, C = x.shape
        gs = N // n
        return (x.reshape(n, gs, C).astype(jnp.float32)
                * masks[:, None, :]).reshape(N, C)

    # Case 1: tiny input (32 x 16) -> single-program resident-VMEM fast path.
    batch1 = 32
    x1 = jax.random.normal(jax.random.PRNGKey(0), (batch1, channels),
                           dtype=jnp.float32)
    out1 = jax.block_until_ready(masksembles1d(x1, masks))
    np.testing.assert_allclose(np.asarray(out1),
                               np.asarray(reference(x1, masks, n)),
                               rtol=0, atol=0)

    # Case 2: force the tiled grid path (resident masks + dynamic row select,
    # multiple row tiles per group) with still-small shapes by shrinking the
    # thresholds: 512 x 16 -> lane-packed to (4, 16, 128), tr=8 -> grid (4, 2).
    batch2 = 512
    x2 = jax.random.normal(jax.random.PRNGKey(0), (batch2, channels),
                           dtype=jnp.float32)
    out2 = jax.block_until_ready(
        masksembles1d(x2, masks,
                      small_bytes_threshold=0,
                      block_bytes_cap=8 * 128 * 4))
    np.testing.assert_allclose(np.asarray(out2),
                               np.asarray(reference(x2, masks, n)),
                               rtol=0, atol=0)

    print("KERNEL_OK")
</pallas_src>

<mosaic_0001>
module attributes {stable_mosaic.version = 11 : i64} {
  func.func @_masksembles_small_kernel(%arg0: memref<4x128xf32, #tpu.memory_space<vmem>>, %arg1: memref<4x1x128xf32, #tpu.memory_space<vmem>>, %arg2: memref<4x1x128xf32, #tpu.memory_space<vmem>>) attributes {dimension_semantics = [], scalar_prefetch = 0 : i64, scratch_operands = 0 : i64, tpu.core_type = #tpu.core_type<tc>} {
    %c0 = arith.constant 0 : index
    %c0_0 = arith.constant 0 : index
    %c0_1 = arith.constant 0 : index
    %0 = vector.load %arg1[%c0, %c0_0, %c0_1] : memref<4x1x128xf32, #tpu.memory_space<vmem>>, vector<4x1x128xf32>
    %c0_2 = arith.constant 0 : index
    %c0_3 = arith.constant 0 : index
    %1 = vector.load %arg0[%c0_2, %c0_3] : memref<4x128xf32, #tpu.memory_space<vmem>>, vector<4x128xf32>
    %2 = vector.shape_cast %1 : vector<4x128xf32> to vector<4x1x128xf32>
    %3 = arith.mulf %0, %2 : vector<4x1x128xf32>
    %c0_4 = arith.constant 0 : index
    %c0_5 = arith.constant 0 : index
    %c0_6 = arith.constant 0 : index
    %4 = vector.load %arg2[%c0_4, %c0_5, %c0_6] : memref<4x1x128xf32, #tpu.memory_space<vmem>>, vector<4x1x128xf32>
    tpu.vector_store %arg2[%c0_4, %c0_5, %c0_6], %3 {strides = array<i32>} : memref<4x1x128xf32, #tpu.memory_space<vmem>>, vector<4x1x128xf32>,
    return
  }
}

</mosaic_0001>

<llo_original>
// kernel: tpu_custom_call.1
$region0: #{tpu_custom_call.1}
  #allocation0 [shape = 'u32[]', space=smem, size = 0x4, offset = 0x4, fixed_abs, tag = 'smem constant byte address 0x4 - core index']
  #allocation1 [shape = 'u32[144,128]{1,0:T(1,128)}', space=vmem, size = 0x12000, scoped, tag = 'internal scratch']
  %s0 = inlined_call_operand.hbm [shape: f32[4,128], index: 0, kind: input, shape index: {}]
  %s1 = inlined_call_operand.hbm [shape: f32[4,1,128], index: 1, kind: input, shape index: {}]
  %s2 = inlined_call_operand.hbm [shape: f32[4,1,128], index: 2, kind: output, shape index: {}]
  %s3 = sld [smem:[#allocation0]]
  $region26: #{tpu_custom_call.1} parent=0
    _
  %s5 = ssub.s32 1, %s3
  %s6 = scalar_select 0, %s5, %s3
  $region1: #{tpu_custom_call.1} parent=0
    #allocation2 [shape = 'u8[2048]{0}', space=vmem, size = 0x800, scoped, tag = 'input window, operand 0, single buffered']
    #allocation3 [shape = 's32[1]{0}', space=sflag, size = 0x4, scoped, tag = 'scoped memory for tpu_custom_call.1']
    #allocation4 [shape = 's32[1]{0}', space=sflag, size = 0x4, scoped, tag = 'scoped memory for tpu_custom_call.1']
    #allocation5 [shape = 'u8[2048]{0}', space=vmem, size = 0x800, scoped, tag = 'input window, operand 1, single buffered']
    #allocation6 [shape = 's32[1]{0}', space=sflag, size = 0x4, scoped, tag = 'scoped memory for tpu_custom_call.1']
    #allocation7 [shape = 'u8[2048]{0}', space=vmem, size = 0x800, scoped, tag = 'output window, operand 0, single buffered']
    %7 = vsyncpa [#allocation3], 0
    %8 = vsyncpa [#allocation6], 0
    %9 = vsyncpa [#allocation4], 0
    // Predicated region
    $region2: #{tpu_custom_call.1} parent=1 // pred_check
      _
    $region3: #{tpu_custom_call.1} parent=1 // pred_check_branch
      %11 = sbr.rel (0) target = $region5
    $region4: #{tpu_custom_call.1} parent=1 // pred_region
      %s13 = ssub.s32 64, 64
      %14 = vsyncadd [#allocation3], %s13
      %s16 = sshll.u32 [#allocation2], 4
      %s17 = int_to_ptr.vmem [resolvable:$true] %s16
      %19 = dma.hbm_to_vmem [thread:$0]  %s0, 64, %s17, [#allocation3]
    $region5: #{tpu_custom_call.1} parent=1 // pred_fallthru
      _
    // Predicated region
    $region6: #{tpu_custom_call.1} parent=1 // pred_check
      _
    $region7: #{tpu_custom_call.1} parent=1 // pred_check_branch
      %21 = sbr.rel (0) target = $region9
    $region8: #{tpu_custom_call.1} parent=1 // pred_region
      %s23 = ssub.s32 64, 64
      %24 = vsyncadd [#allocation6], %s23
      %s25 = sshll.u32 [#allocation5], 4
      %s26 = int_to_ptr.vmem [resolvable:$true] %s25
      %31 = dma.hbm_to_vmem [thread:$0]  %s1, 64, %s26, [#allocation6], 16, 16, 1
    $region9: #{tpu_custom_call.1} parent=1 // pred_fallthru
      _
    // Predicated region
    $region10: #{tpu_custom_call.1} parent=1 // pred_check
      _
    $region11: #{tpu_custom_call.1} parent=1 // pred_check_branch
      %33 = sbr.rel (0) target = $region13
    $region12: #{tpu_custom_call.1} parent=1 // pred_region
      %34 = dma.done [#allocation3], 64
    $region13: #{tpu_custom_call.1} parent=1 // pred_fallthru
      _
    // Predicated region
    $region14: #{tpu_custom_call.1} parent=1 // pred_check
      _
    $region15: #{tpu_custom_call.1} parent=1 // pred_check_branch
      %36 = sbr.rel (0) target = $region17
    $region16: #{tpu_custom_call.1} parent=1 // pred_region
      %37 = dma.done [#allocation6], 64
    $region17: #{tpu_custom_call.1} parent=1 // pred_fallthru
      _
    %v38 = vld [vmem:[#allocation5] sm:$0x1]
    %v39 = vld [vmem:[#allocation5 + $0x1] sm:$0x1]
    %v40 = vld [vmem:[#allocation5 + $0x2] sm:$0x1]
    %v41 = vld [vmem:[#allocation5 + $0x3] sm:$0x1]
    %v42 = vld [vmem:[#allocation2] sm:$0xf]
    %v45 = vunpack.c.l.s4 1966171168
    %v46 = vunpack.c.0.s8 %v45
    %v47 = vlaneseq
    %v48 = vshrl.u32 %v47, 7
    %v49 = vsub.s32 %v46, %v48
    %v50 = vrot.slane %v42, %v49
    %v51 = vcombine.high %v50, %v50
    %v53 = vunpack.c.l.s4 1966171168
    %v54 = vunpack.c.0.s8 %v53
    %v55 = vlaneseq
    %v56 = vshrl.u32 %v55, 7
    %v57 = vsub.s32 %v54, %v56
    %v58 = vrot.slane %v50, %v57
    %v60 = vunpack.c.l.s4 1966171168
    %v61 = vunpack.c.0.s8 %v60
    %v62 = vlaneseq
    %v63 = vshrl.u32 %v62, 7
    %v64 = vsub.s32 %v61, %v63
    %v65 = vrot.slane %v51, %v64
    %v66 = vcombine.high %v58, %v58
    %v67 = vcombine.high %v65, %v65
    %v72 = vmul.f32 %v38, %v58
    %v73 = vmul.f32 %v39, %v65
    %v74 = vmul.f32 %v40, %v66
    %v75 = vmul.f32 %v41, %v67
    %76 = vst [vmem:[#allocation7] sm:$0x1] %v72
    %77 = vst [vmem:[#allocation7 + $0x1] sm:$0x1] %v73
    %78 = vst [vmem:[#allocation7 + $0x2] sm:$0x1] %v74
    %79 = vst [vmem:[#allocation7 + $0x3] sm:$0x1] %v75
    // Predicated region
    $region18: #{tpu_custom_call.1} parent=1 // pred_check
      _
    $region19: #{tpu_custom_call.1} parent=1 // pred_check_branch
      %81 = sbr.rel (0) target = $region21
    $region20: #{tpu_custom_call.1} parent=1 // pred_region
      %s83 = ssub.s32 64, 64
      %84 = vsyncadd [#allocation4], %s83
      %s85 = sshll.u32 [#allocation7], 4
      %s86 = int_to_ptr.vmem [resolvable:$true] %s85
      %91 = dma.vmem_to_hbm [thread:$0]  %s86, 64, %s2, [#allocation4], 16, 16, 1
    $region21: #{tpu_custom_call.1} parent=1 // pred_fallthru
      _
    // Predicated region
    $region22: #{tpu_custom_call.1} parent=1 // pred_check
      _
    $region23: #{tpu_custom_call.1} parent=1 // pred_check_branch
      %93 = sbr.rel (0) target = $region25
    $region24: #{tpu_custom_call.1} parent=1 // pred_region
      %94 = dma.done [#allocation4], 64
    $region25: #{tpu_custom_call.1} parent=1 // pred_fallthru
      _
    %95 = vsyncpa [#allocation3], 1
    %96 = vsyncpa [#allocation6], 1
    %97 = vsyncpa [#allocation4], 1

</llo_original>
